<compile_context>
chip_gen: v7x
topology: tpu7x:2x2x1
jax: 0.10.0
libtpu: 0.0.40
codegen_flags: <defaults>
</compile_context>

<pallas_src>
import functools

import jax
import jax.numpy as jnp
import numpy as np
from jax import lax
from jax.experimental import pallas as pl
from jax.experimental.pallas import tpu as pltpu

_PAD = 128  # lane-aligned halo pad on each side of the flattened spatial axis


def _parallel_model_kernel(x_ref, mask_ref, wc_ref, bc_ref, wh_ref, bh_ref,
                           o1_ref, o2_ref, xpad_ref, patches_ref, *, H, W, N1):
    """One batch element per grid step.

    x_ref      : (1, Cin, H*W)        bf16 flattened NCHW input
    mask_ref   : (9, H*W)             bf16 0/1 boundary masks per 3x3 tap
    wc_ref     : (Chid, 9*Cin)        bf16 conv weight, K ordered (tap, cin)
    bc_ref     : (Chid, 1)            f32 conv bias
    wh_ref     : (N1+N2, Chid)        f32 fused 1x1-head weights
    bh_ref     : (N1+N2, 1)           f32 fused 1x1-head biases
    o1_ref     : (1, N1, H*W)         f32 head1 output (lane-dense, NCHW order)
    o2_ref     : (1, N2, H*W)         f32 head2 output
    xpad_ref   : (Cin, 2*_PAD+H*W)    bf16 scratch: lane-padded flattened image
    patches_ref: (9*Cin, H*W)         bf16 scratch: im2col patch matrix
    """
    cin = x_ref.shape[1]
    hw = H * W

    # Zero only the two halo strips (tiny, lane-tile aligned).  Done every step
    # (cheap: 2 stores) so correctness does not depend on scratch persistence
    # when the batch axis is sharded across TensorCores.  The interior is fully
    # overwritten below, so no full-buffer memset is ever needed.
    zpad = jnp.zeros((cin, _PAD), dtype=xpad_ref.dtype)
    xpad_ref[:, :_PAD] = zpad
    xpad_ref[:, _PAD + hw:] = zpad
    # Lane-tile-aligned pure bf16 move (offset 128, width multiple of 128).
    xpad_ref[:, _PAD:_PAD + hw] = x_ref[0]

    # im2col, channels-on-sublane / spatial-on-lane.  Each 3x3 tap is a
    # statically shifted full-width lane slice of the flattened image times a
    # precomputed 0/1 boundary mask (zero-padding semantics).  Pixels that the
    # flat shift would fetch from the wrong row / out of range are exactly the
    # masked-out ones, and the halo strips guarantee the out-of-range lanes
    # hold finite zeros.
    for dy in range(3):
        for dx in range(3):
            tap = dy * 3 + dx
            off = (dy - 1) * W + (dx - 1)
            shifted = xpad_ref[:, _PAD + off:_PAD + off + hw]       # (Cin, HW)
            patches_ref[tap * cin:(tap + 1) * cin, :] = (
                shifted * mask_ref[tap:tap + 1, :])

    # Conv: one fat-K matmul, bf16 operands, f32 accumulation on the MXU.
    acc = jnp.dot(wc_ref[...], patches_ref[...],
                  preferred_element_type=jnp.float32)               # (Chid, HW)
    hidden = jnp.maximum(acc + bc_ref[...], 0.0)                    # bias + ReLU

    # Both 1x1-conv heads fused into one matmul; output channels on sublanes,
    # H*W stays lane-dense for unmasked full-width stores.
    # (Kept f32 here for parity with the PyTorch reference; cast to bf16 at
    #  production shapes if downstream tolerates it.)
    heads = jnp.dot(wh_ref[...], hidden,
                    preferred_element_type=jnp.float32) + bh_ref[...]

    o1_ref[0] = heads[:N1].astype(o1_ref.dtype)                     # (N1, HW)
    o2_ref[0] = heads[N1:].astype(o2_ref.dtype)                     # (N2, HW)


def parallel_model_forward(x_nchw, params):
    """Pallas implementation of ParallelModel.forward.

    x_nchw: (N, Cin, H, W) float32
    params: dict with conv_w (Chid,Cin,3,3), conv_b (Chid,),
            h1_w (N1,Chid,1,1), h1_b (N1,), h2_w (N2,Chid,1,1), h2_b (N2,)
    returns (out1_nchw, out2_nchw) in float32, NCHW.
    """
    n, cin, h, w = x_nchw.shape
    chid = params["conv_w"].shape[0]
    n1 = params["h1_w"].shape[0]
    n2 = params["h2_w"].shape[0]
    hw = h * w
    assert hw % 128 == 0, "flattened spatial axis must be lane-dense"

    # NCHW flattened is already channels-on-sublane / spatial-on-lane: no
    # transpose anywhere, just a free reshape + bf16 cast.
    x_flat = x_nchw.reshape(n, cin, hw).astype(jnp.bfloat16)

    # Conv weight OIHW -> (O, ky, kx, I) -> (Chid, 9*Cin): K ordering
    # (tap, cin) matches the in-kernel patch row layout.
    wc = jnp.transpose(params["conv_w"], (0, 2, 3, 1)).reshape(chid, 9 * cin)
    wc = wc.astype(jnp.bfloat16)
    bc = params["conv_b"].reshape(chid, 1).astype(jnp.float32)

    # Both 1x1 heads fused into one (N1+N2, Chid) weight / (N1+N2, 1) bias.
    wh = jnp.concatenate([params["h1_w"][:, :, 0, 0],
                          params["h2_w"][:, :, 0, 0]],
                         axis=0).astype(jnp.float32)
    bh = jnp.concatenate([params["h1_b"], params["h2_b"]]).reshape(
        n1 + n2, 1).astype(jnp.float32)

    # 0/1 boundary masks per 3x3 tap (host-side constant, 9*H*W bf16).
    mask_np = np.zeros((9, h, w), np.float32)
    for dy in range(3):
        for dx in range(3):
            ys = slice(max(0, 1 - dy), min(h, h + 1 - dy))
            xs = slice(max(0, 1 - dx), min(w, w + 1 - dx))
            mask_np[dy * 3 + dx, ys, xs] = 1.0
    mask = jnp.asarray(mask_np.reshape(9, hw), dtype=jnp.bfloat16)

    kernel = functools.partial(_parallel_model_kernel, H=h, W=w, N1=n1)

    # Grid-constant operands: constant block index -> Pallas does not re-DMA
    # them between grid steps.
    const = lambda shape: pl.BlockSpec(shape, lambda b: (0,) * len(shape))

    out1, out2 = pl.pallas_call(
        kernel,
        out_shape=(
            jax.ShapeDtypeStruct((n, n1, hw), jnp.float32),
            jax.ShapeDtypeStruct((n, n2, hw), jnp.float32),
        ),
        grid_spec=pltpu.PrefetchScalarGridSpec(
            num_scalar_prefetch=0,
            grid=(n,),
            in_specs=[
                pl.BlockSpec((1, cin, hw), lambda b: (b, 0, 0)),
                const((9, hw)),
                const((chid, 9 * cin)),
                const((chid, 1)),
                const((n1 + n2, chid)),
                const((n1 + n2, 1)),
            ],
            out_specs=[
                pl.BlockSpec((1, n1, hw), lambda b: (b, 0, 0)),
                pl.BlockSpec((1, n2, hw), lambda b: (b, 0, 0)),
            ],
            scratch_shapes=[
                pltpu.VMEM((cin, 2 * _PAD + hw), jnp.bfloat16),  # padded image
                pltpu.VMEM((9 * cin, hw), jnp.bfloat16),         # im2col patches
            ],
        ),
        compiler_params=pltpu.CompilerParams(
            dimension_semantics=("parallel",)),
    )(x_flat, mask, wc, bc, wh, bh)

    # (N, C_out, H*W) is already NCHW modulo a free trailing reshape.
    return (out1.reshape(n, n1, h, w), out2.reshape(n, n2, h, w))


def _reference_forward(x_nchw, params):
    """Pure-JAX f32 reference (lax conv) for correctness checking."""
    dn = lax.conv_dimension_numbers(x_nchw.shape, params["conv_w"].shape,
                                    ("NCHW", "OIHW", "NCHW"))
    hidden = lax.conv_general_dilated(
        x_nchw, params["conv_w"], (1, 1), ((1, 1), (1, 1)),
        dimension_numbers=dn) + params["conv_b"][None, :, None, None]
    hidden = jnp.maximum(hidden, 0.0)

    def head(hval, wgt, bias):
        dnh = lax.conv_dimension_numbers(hval.shape, wgt.shape,
                                         ("NCHW", "OIHW", "NCHW"))
        return lax.conv_general_dilated(
            hval, wgt, (1, 1), ((0, 0), (0, 0)),
            dimension_numbers=dnh) + bias[None, :, None, None]

    return (head(hidden, params["h1_w"], params["h1_b"]),
            head(hidden, params["h2_w"], params["h2_b"]))


if __name__ == "__main__":
    # Small shapes consistent with the module: 3x3 conv Cin->Chid, two 1x1 heads.
    N, CIN, H, W = 2, 4, 16, 16
    CHID, N1, N2 = 32, 8, 2

    key = jax.random.PRNGKey(0)
    ks = jax.random.split(key, 7)

    params = {
        "conv_w": jax.random.normal(ks[0], (CHID, CIN, 3, 3), jnp.float32)
                  * (1.0 / np.sqrt(CIN * 9)),
        "conv_b": jax.random.normal(ks[1], (CHID,), jnp.float32) * 0.1,
        "h1_w": jax.random.normal(ks[2], (N1, CHID, 1, 1), jnp.float32)
                * (1.0 / np.sqrt(CHID)),
        "h1_b": jax.random.normal(ks[3], (N1,), jnp.float32) * 0.1,
        "h2_w": jax.random.normal(ks[4], (N2, CHID, 1, 1), jnp.float32)
                * (1.0 / np.sqrt(CHID)),
        "h2_b": jax.random.normal(ks[5], (N2,), jnp.float32) * 0.1,
    }
    x = jax.random.normal(ks[6], (N, CIN, H, W), jnp.float32)

    out1, out2 = parallel_model_forward(x, params)
    jax.block_until_ready((out1, out2))

    # Reference is pure f32; the kernel uses bf16 conv operands (f32 accum),
    # so tolerances are loosened accordingly (deliberate approximation).
    ref1, ref2 = _reference_forward(x, params)
    np.testing.assert_allclose(np.asarray(out1), np.asarray(ref1),
                               rtol=2e-2, atol=2e-2)
    np.testing.assert_allclose(np.asarray(out2), np.asarray(ref2),
                               rtol=2e-2, atol=2e-2)

    print("KERNEL_OK")
</pallas_src>

<mosaic_0001>
module attributes {stable_mosaic.version = 11 : i64} {
  func.func @_parallel_model_kernel(%arg0: i32, %arg1: memref<1x4x256xbf16, #tpu.memory_space<vmem>>, %arg2: memref<9x256xbf16, #tpu.memory_space<vmem>>, %arg3: memref<32x36xbf16, #tpu.memory_space<vmem>>, %arg4: memref<32x1xf32, #tpu.memory_space<vmem>>, %arg5: memref<10x32xf32, #tpu.memory_space<vmem>>, %arg6: memref<10x1xf32, #tpu.memory_space<vmem>>, %arg7: memref<1x8x256xf32, #tpu.memory_space<vmem>>, %arg8: memref<1x2x256xf32, #tpu.memory_space<vmem>>, %arg9: memref<4x512xbf16, #tpu.memory_space<vmem>>, %arg10: memref<36x256xbf16, #tpu.memory_space<vmem>>) attributes {dimension_semantics = [#tpu.dimension_semantics<parallel>], iteration_bounds = array<i64: 2>, scalar_prefetch = 0 : i64, scratch_operands = 2 : i64, tpu.core_type = #tpu.core_type<tc>, window_params = [{transform_indices = @transform_0, window_bounds = array<i64: 1, 4, 256>}, {pipeline_mode = #tpu.pipeline_mode<synchronous>, transform_indices = @transform_1, window_bounds = array<i64: 9, 256>}, {pipeline_mode = #tpu.pipeline_mode<synchronous>, transform_indices = @transform_2, window_bounds = array<i64: 32, 36>}, {pipeline_mode = #tpu.pipeline_mode<synchronous>, transform_indices = @transform_3, window_bounds = array<i64: 32, 1>}, {pipeline_mode = #tpu.pipeline_mode<synchronous>, transform_indices = @transform_4, window_bounds = array<i64: 10, 32>}, {pipeline_mode = #tpu.pipeline_mode<synchronous>, transform_indices = @transform_5, window_bounds = array<i64: 10, 1>}, {transform_indices = @transform_6, window_bounds = array<i64: 1, 8, 256>}, {transform_indices = @transform_7, window_bounds = array<i64: 1, 2, 256>}]} {
    %cst = arith.constant 0.000000e+00 : bf16
    %0 = vector.broadcast %cst : bf16 to vector<4x128xbf16>
    %c0 = arith.constant 0 : index
    %c0_0 = arith.constant 0 : index
    %1 = vector.load %arg9[%c0, %c0_0] : memref<4x512xbf16, #tpu.memory_space<vmem>>, vector<4x128xbf16>
    tpu.vector_store %arg9[%c0, %c0_0], %0 {strides = array<i32>} : memref<4x512xbf16, #tpu.memory_space<vmem>>, vector<4x128xbf16>,
    %c0_1 = arith.constant 0 : index
    %c384 = arith.constant 384 : index
    %2 = vector.load %arg9[%c0_1, %c384] : memref<4x512xbf16, #tpu.memory_space<vmem>>, vector<4x128xbf16>
    tpu.vector_store %arg9[%c0_1, %c384], %0 {strides = array<i32>} : memref<4x512xbf16, #tpu.memory_space<vmem>>, vector<4x128xbf16>,
    %c0_2 = arith.constant 0 : index
    %c0_3 = arith.constant 0 : index
    %c0_4 = arith.constant 0 : index
    %3 = vector.load %arg1[%c0_2, %c0_3, %c0_4] : memref<1x4x256xbf16, #tpu.memory_space<vmem>>, vector<1x4x256xbf16>
    %4 = vector.shape_cast %3 : vector<1x4x256xbf16> to vector<4x256xbf16>
    %c0_5 = arith.constant 0 : index
    %c128 = arith.constant 128 : index
    %5 = vector.load %arg9[%c0_5, %c128] : memref<4x512xbf16, #tpu.memory_space<vmem>>, vector<4x256xbf16>
    tpu.vector_store %arg9[%c0_5, %c128], %4 {strides = array<i32>} : memref<4x512xbf16, #tpu.memory_space<vmem>>, vector<4x256xbf16>,
    %c0_6 = arith.constant 0 : index
    %c111 = arith.constant 111 : index
    %6 = vector.load %arg9[%c0_6, %c111] : memref<4x512xbf16, #tpu.memory_space<vmem>>, vector<4x256xbf16>
    %c0_7 = arith.constant 0 : index
    %c0_8 = arith.constant 0 : index
    %7 = vector.load %arg2[%c0_7, %c0_8] : memref<9x256xbf16, #tpu.memory_space<vmem>>, vector<1x256xbf16>
    %8 = vector.broadcast %7 : vector<1x256xbf16> to vector<4x256xbf16>
    %9 = arith.mulf %6, %8 : vector<4x256xbf16>
    %c0_9 = arith.constant 0 : index
    %c0_10 = arith.constant 0 : index
    %10 = vector.load %arg10[%c0_9, %c0_10] : memref<36x256xbf16, #tpu.memory_space<vmem>>, vector<4x256xbf16>
    tpu.vector_store %arg10[%c0_9, %c0_10], %9 {strides = array<i32>} : memref<36x256xbf16, #tpu.memory_space<vmem>>, vector<4x256xbf16>,
    %c0_11 = arith.constant 0 : index
    %c112 = arith.constant 112 : index
    %11 = vector.load %arg9[%c0_11, %c112] : memref<4x512xbf16, #tpu.memory_space<vmem>>, vector<4x256xbf16>
    %c1 = arith.constant 1 : index
    %c0_12 = arith.constant 0 : index
    %12 = vector.load %arg2[%c1, %c0_12] : memref<9x256xbf16, #tpu.memory_space<vmem>>, vector<1x256xbf16>
    %13 = vector.broadcast %12 : vector<1x256xbf16> to vector<4x256xbf16>
    %14 = arith.mulf %11, %13 : vector<4x256xbf16>
    %c4 = arith.constant 4 : index
    %c0_13 = arith.constant 0 : index
    %15 = vector.load %arg10[%c4, %c0_13] : memref<36x256xbf16, #tpu.memory_space<vmem>>, vector<4x256xbf16>
    tpu.vector_store %arg10[%c4, %c0_13], %14 {strides = array<i32>} : memref<36x256xbf16, #tpu.memory_space<vmem>>, vector<4x256xbf16>,
    %c0_14 = arith.constant 0 : index
    %c113 = arith.constant 113 : index
    %16 = vector.load %arg9[%c0_14, %c113] : memref<4x512xbf16, #tpu.memory_space<vmem>>, vector<4x256xbf16>
    %c2 = arith.constant 2 : index
    %c0_15 = arith.constant 0 : index
    %17 = vector.load %arg2[%c2, %c0_15] : memref<9x256xbf16, #tpu.memory_space<vmem>>, vector<1x256xbf16>
    %18 = vector.broadcast %17 : vector<1x256xbf16> to vector<4x256xbf16>
    %19 = arith.mulf %16, %18 : vector<4x256xbf16>
    %c8 = arith.constant 8 : index
    %c0_16 = arith.constant 0 : index
    %20 = vector.load %arg10[%c8, %c0_16] : memref<36x256xbf16, #tpu.memory_space<vmem>>, vector<4x256xbf16>
    tpu.vector_store %arg10[%c8, %c0_16], %19 {strides = array<i32>} : memref<36x256xbf16, #tpu.memory_space<vmem>>, vector<4x256xbf16>,
    %c0_17 = arith.constant 0 : index
    %c127 = arith.constant 127 : index
    %21 = vector.load %arg9[%c0_17, %c127] : memref<4x512xbf16, #tpu.memory_space<vmem>>, vector<4x256xbf16>
    %c3 = arith.constant 3 : index
    %c0_18 = arith.constant 0 : index
    %22 = vector.load %arg2[%c3, %c0_18] : memref<9x256xbf16, #tpu.memory_space<vmem>>, vector<1x256xbf16>
    %23 = vector.broadcast %22 : vector<1x256xbf16> to vector<4x256xbf16>
    %24 = arith.mulf %21, %23 : vector<4x256xbf16>
    %c12 = arith.constant 12 : index
    %c0_19 = arith.constant 0 : index
    %25 = vector.load %arg10[%c12, %c0_19] : memref<36x256xbf16, #tpu.memory_space<vmem>>, vector<4x256xbf16>
    tpu.vector_store %arg10[%c12, %c0_19], %24 {strides = array<i32>} : memref<36x256xbf16, #tpu.memory_space<vmem>>, vector<4x256xbf16>,
    %c0_20 = arith.constant 0 : index
    %c128_21 = arith.constant 128 : index
    %26 = vector.load %arg9[%c0_20, %c128_21] : memref<4x512xbf16, #tpu.memory_space<vmem>>, vector<4x256xbf16>
    %c4_22 = arith.constant 4 : index
    %c0_23 = arith.constant 0 : index
    %27 = vector.load %arg2[%c4_22, %c0_23] : memref<9x256xbf16, #tpu.memory_space<vmem>>, vector<1x256xbf16>
    %28 = vector.broadcast %27 : vector<1x256xbf16> to vector<4x256xbf16>
    %29 = arith.mulf %26, %28 : vector<4x256xbf16>
    %c16 = arith.constant 16 : index
    %c0_24 = arith.constant 0 : index
    %30 = vector.load %arg10[%c16, %c0_24] : memref<36x256xbf16, #tpu.memory_space<vmem>>, vector<4x256xbf16>
    tpu.vector_store %arg10[%c16, %c0_24], %29 {strides = array<i32>} : memref<36x256xbf16, #tpu.memory_space<vmem>>, vector<4x256xbf16>,
    %c0_25 = arith.constant 0 : index
    %c129 = arith.constant 129 : index
    %31 = vector.load %arg9[%c0_25, %c129] : memref<4x512xbf16, #tpu.memory_space<vmem>>, vector<4x256xbf16>
    %c5 = arith.constant 5 : index
    %c0_26 = arith.constant 0 : index
    %32 = vector.load %arg2[%c5, %c0_26] : memref<9x256xbf16, #tpu.memory_space<vmem>>, vector<1x256xbf16>
    %33 = vector.broadcast %32 : vector<1x256xbf16> to vector<4x256xbf16>
    %34 = arith.mulf %31, %33 : vector<4x256xbf16>
    %c20 = arith.constant 20 : index
    %c0_27 = arith.constant 0 : index
    %35 = vector.load %arg10[%c20, %c0_27] : memref<36x256xbf16, #tpu.memory_space<vmem>>, vector<4x256xbf16>
    tpu.vector_store %arg10[%c20, %c0_27], %34 {strides = array<i32>} : memref<36x256xbf16, #tpu.memory_space<vmem>>, vector<4x256xbf16>,
    %c0_28 = arith.constant 0 : index
    %c143 = arith.constant 143 : index
    %36 = vector.load %arg9[%c0_28, %c143] : memref<4x512xbf16, #tpu.memory_space<vmem>>, vector<4x256xbf16>
    %c6 = arith.constant 6 : index
    %c0_29 = arith.constant 0 : index
    %37 = vector.load %arg2[%c6, %c0_29] : memref<9x256xbf16, #tpu.memory_space<vmem>>, vector<1x256xbf16>
    %38 = vector.broadcast %37 : vector<1x256xbf16> to vector<4x256xbf16>
    %39 = arith.mulf %36, %38 : vector<4x256xbf16>
    %c24 = arith.constant 24 : index
    %c0_30 = arith.constant 0 : index
    %40 = vector.load %arg10[%c24, %c0_30] : memref<36x256xbf16, #tpu.memory_space<vmem>>, vector<4x256xbf16>
    tpu.vector_store %arg10[%c24, %c0_30], %39 {strides = array<i32>} : memref<36x256xbf16, #tpu.memory_space<vmem>>, vector<4x256xbf16>,
    %c0_31 = arith.constant 0 : index
    %c144 = arith.constant 144 : index
    %41 = vector.load %arg9[%c0_31, %c144] : memref<4x512xbf16, #tpu.memory_space<vmem>>, vector<4x256xbf16>
    %c7 = arith.constant 7 : index
    %c0_32 = arith.constant 0 : index
    %42 = vector.load %arg2[%c7, %c0_32] : memref<9x256xbf16, #tpu.memory_space<vmem>>, vector<1x256xbf16>
    %43 = vector.broadcast %42 : vector<1x256xbf16> to vector<4x256xbf16>
    %44 = arith.mulf %41, %43 : vector<4x256xbf16>
    %c28 = arith.constant 28 : index
    %c0_33 = arith.constant 0 : index
    %45 = vector.load %arg10[%c28, %c0_33] : memref<36x256xbf16, #tpu.memory_space<vmem>>, vector<4x256xbf16>
    tpu.vector_store %arg10[%c28, %c0_33], %44 {strides = array<i32>} : memref<36x256xbf16, #tpu.memory_space<vmem>>, vector<4x256xbf16>,
    %c0_34 = arith.constant 0 : index
    %c145 = arith.constant 145 : index
    %46 = vector.load %arg9[%c0_34, %c145] : memref<4x512xbf16, #tpu.memory_space<vmem>>, vector<4x256xbf16>
    %c8_35 = arith.constant 8 : index
    %c0_36 = arith.constant 0 : index
    %47 = vector.load %arg2[%c8_35, %c0_36] : memref<9x256xbf16, #tpu.memory_space<vmem>>, vector<1x256xbf16>
    %48 = vector.broadcast %47 : vector<1x256xbf16> to vector<4x256xbf16>
    %49 = arith.mulf %46, %48 : vector<4x256xbf16>
    %c32 = arith.constant 32 : index
    %c0_37 = arith.constant 0 : index
    %50 = vector.load %arg10[%c32, %c0_37] : memref<36x256xbf16, #tpu.memory_space<vmem>>, vector<4x256xbf16>
    tpu.vector_store %arg10[%c32, %c0_37], %49 {strides = array<i32>} : memref<36x256xbf16, #tpu.memory_space<vmem>>, vector<4x256xbf16>,
    %c0_38 = arith.constant 0 : index
    %c0_39 = arith.constant 0 : index
    %51 = vector.load %arg3[%c0_38, %c0_39] : memref<32x36xbf16, #tpu.memory_space<vmem>>, vector<32x36xbf16>
    %c0_40 = arith.constant 0 : index
    %c0_41 = arith.constant 0 : index
    %52 = vector.load %arg10[%c0_40, %c0_41] : memref<36x256xbf16, #tpu.memory_space<vmem>>, vector<36x256xbf16>
    %cst_42 = arith.constant dense<0.000000e+00> : vector<32x256xf32>
    %53 = tpu.matmul %51, %52, %cst_42 {dimension_numbers = #tpu.dot_dimension_numbers<[1], [0], [0], [1], [0, 0, 1, 1], [], []>} : vector<32x36xbf16>, vector<36x256xbf16>, vector<32x256xf32> -> vector<32x256xf32>
    %c0_43 = arith.constant 0 : index
    %c0_44 = arith.constant 0 : index
    %54 = vector.load %arg4[%c0_43, %c0_44] : memref<32x1xf32, #tpu.memory_space<vmem>>, vector<32x1xf32>
    %55 = vector.broadcast %54 : vector<32x1xf32> to vector<32x256xf32>
    %56 = arith.addf %53, %55 : vector<32x256xf32>
    %cst_45 = arith.constant 0.000000e+00 : f32
    %57 = vector.broadcast %cst_45 : f32 to vector<32x256xf32>
    %58 = arith.maximumf %56, %57 : vector<32x256xf32>
    %c0_46 = arith.constant 0 : index
    %c0_47 = arith.constant 0 : index
    %59 = vector.load %arg5[%c0_46, %c0_47] : memref<10x32xf32, #tpu.memory_space<vmem>>, vector<10x32xf32>
    %cst_48 = arith.constant dense<0.000000e+00> : vector<10x256xf32>
    %60 = tpu.matmul %59, %58, %cst_48 {dimension_numbers = #tpu.dot_dimension_numbers<[1], [0], [0], [1], [0, 0, 1, 1], [], []>} : vector<10x32xf32>, vector<32x256xf32>, vector<10x256xf32> -> vector<10x256xf32>
    %c0_49 = arith.constant 0 : index
    %c0_50 = arith.constant 0 : index
    %61 = vector.load %arg6[%c0_49, %c0_50] : memref<10x1xf32, #tpu.memory_space<vmem>>, vector<10x1xf32>
    %62 = vector.broadcast %61 : vector<10x1xf32> to vector<10x256xf32>
    %63 = arith.addf %60, %62 : vector<10x256xf32>
    %64 = vector.extract_strided_slice %63 {offsets = [0, 0], sizes = [8, 256], strides = [1, 1]} : vector<10x256xf32> to vector<8x256xf32>
    %c0_51 = arith.constant 0 : index
    %c0_52 = arith.constant 0 : index
    %c0_53 = arith.constant 0 : index
    %65 = vector.load %arg7[%c0_51, %c0_52, %c0_53] : memref<1x8x256xf32, #tpu.memory_space<vmem>>, vector<1x8x256xf32>
    %66 = vector.shape_cast %65 : vector<1x8x256xf32> to vector<8x256xf32>
    %67 = vector.shape_cast %64 : vector<8x256xf32> to vector<1x8x256xf32>
    tpu.vector_store %arg7[%c0_51, %c0_52, %c0_53], %67 {strides = array<i32>} : memref<1x8x256xf32, #tpu.memory_space<vmem>>, vector<1x8x256xf32>,
    %68 = vector.extract_strided_slice %63 {offsets = [8, 0], sizes = [2, 256], strides = [1, 1]} : vector<10x256xf32> to vector<2x256xf32>
    %c0_54 = arith.constant 0 : index
    %c0_55 = arith.constant 0 : index
    %c0_56 = arith.constant 0 : index
    %69 = vector.load %arg8[%c0_54, %c0_55, %c0_56] : memref<1x2x256xf32, #tpu.memory_space<vmem>>, vector<1x2x256xf32>
    %70 = vector.shape_cast %69 : vector<1x2x256xf32> to vector<2x256xf32>
    %71 = vector.shape_cast %68 : vector<2x256xf32> to vector<1x2x256xf32>
    tpu.vector_store %arg8[%c0_54, %c0_55, %c0_56], %71 {strides = array<i32>} : memref<1x2x256xf32, #tpu.memory_space<vmem>>, vector<1x2x256xf32>,
    return
  }
  func.func @transform_0(%arg0: i32) -> (i32, i32, i32) {
    %c0_i32 = arith.constant 0 : i32
    %c0_i32_0 = arith.constant 0 : i32
    %c0_i32_1 = arith.constant 0 : i32
    return %arg0, %c0_i32, %c0_i32_0 : i32, i32, i32
  }
  func.func @transform_1(%arg0: i32) -> (i32, i32) {
    %c0_i32 = arith.constant 0 : i32
    %c0_i32_0 = arith.constant 0 : i32
    %c0_i32_1 = arith.constant 0 : i32
    return %c0_i32, %c0_i32_0 : i32, i32
  }
  func.func @transform_2(%arg0: i32) -> (i32, i32) {
    %c0_i32 = arith.constant 0 : i32
    %c0_i32_0 = arith.constant 0 : i32
    %c0_i32_1 = arith.constant 0 : i32
    return %c0_i32, %c0_i32_0 : i32, i32
  }
  func.func @transform_3(%arg0: i32) -> (i32, i32) {
    %c0_i32 = arith.constant 0 : i32
    %c0_i32_0 = arith.constant 0 : i32
    %c0_i32_1 = arith.constant 0 : i32
    return %c0_i32, %c0_i32_0 : i32, i32
  }
  func.func @transform_4(%arg0: i32) -> (i32, i32) {
    %c0_i32 = arith.constant 0 : i32
    %c0_i32_0 = arith.constant 0 : i32
    %c0_i32_1 = arith.constant 0 : i32
    return %c0_i32, %c0_i32_0 : i32, i32
  }
  func.func @transform_5(%arg0: i32) -> (i32, i32) {
    %c0_i32 = arith.constant 0 : i32
    %c0_i32_0 = arith.constant 0 : i32
    %c0_i32_1 = arith.constant 0 : i32
    return %c0_i32, %c0_i32_0 : i32, i32
  }
  func.func @transform_6(%arg0: i32) -> (i32, i32, i32) {
    %c0_i32 = arith.constant 0 : i32
    %c0_i32_0 = arith.constant 0 : i32
    %c0_i32_1 = arith.constant 0 : i32
    return %arg0, %c0_i32, %c0_i32_0 : i32, i32, i32
  }
  func.func @transform_7(%arg0: i32) -> (i32, i32, i32) {
    %c0_i32 = arith.constant 0 : i32
    %c0_i32_0 = arith.constant 0 : i32
    %c0_i32_1 = arith.constant 0 : i32
    return %arg0, %c0_i32, %c0_i32_0 : i32, i32, i32
  }
}

</mosaic_0001>

<llo_original>
// kernel: tpu_custom_call.1
$region0: #{tpu_custom_call.1}
  #allocation0 [shape = 'u32[]', space=smem, size = 0x4, offset = 0x4, fixed_abs, tag = 'smem constant byte address 0x4 - core index']
  #allocation1 [shape = 'u32[144,128]{1,0:T(1,128)}', space=vmem, size = 0x12000, scoped, tag = 'internal scratch']
  #allocation2 [shape = 'bf16[4,512]{1,0:T(4,128)(2,1)}', space=vmem, size = 0x1000, scoped, tag = 'scratch operand']
  #allocation3 [shape = 'bf16[36,256]{1,0:T(8,128)(2,1)}', space=vmem, size = 0x5000, scoped, tag = 'scratch operand']
  %s0 = inlined_call_operand.hbm [shape: bf16[2,4,256], index: 0, kind: input, shape index: {}]
  %s1 = inlined_call_operand.vmem [shape: bf16[9,256], index: 1, kind: input, shape index: {}]
  %s2 = inlined_call_operand.vmem [shape: bf16[32,36], index: 2, kind: input, shape index: {}]
  %s3 = inlined_call_operand.vmem [shape: f32[32,1], index: 3, kind: input, shape index: {}]
  %s4 = inlined_call_operand.vmem [shape: f32[10,32], index: 4, kind: input, shape index: {}]
  %s5 = inlined_call_operand.vmem [shape: f32[10,1], index: 5, kind: input, shape index: {}]
  %s6 = inlined_call_operand.hbm [shape: f32[2,8,256], index: 6, kind: output, shape index: {0}]
  %s7 = inlined_call_operand.hbm [shape: f32[2,2,256], index: 7, kind: output, shape index: {1}]
  %8 = xla_tuple %s6, %s7
  %s9 = sld [smem:[#allocation0]]
  $region69: #{tpu_custom_call.1} parent=0
    _
  %s11 = ssub.s32 1, %s9
  %s12 = scalar_select 0, %s11, %s9
  $region1: #{tpu_custom_call.1} parent=0
    #allocation4 [shape = 'u8[4096]{0}', space=vmem, size = 0x1000, scoped, tag = 'input window, operand 0']
    #allocation5 [shape = 's32[2]{0}', space=sflag, size = 0x8, scoped, tag = 'scoped memory for tpu_custom_call.1']
    #allocation6 [shape = 's32[2]{0}', space=sflag, size = 0x8, scoped, tag = 'scoped memory for tpu_custom_call.1']
    #allocation7 [shape = 'u8[16384]{0}', space=vmem, size = 0x4000, scoped, tag = 'output window, operand 0']
    #allocation8 [shape = 'u8[4096]{0}', space=vmem, size = 0x1000, scoped, tag = 'output window, operand 1']
    #allocation9 [shape = 's32[2]{0}', space=sflag, size = 0x8, scoped, tag = 'scoped memory for tpu_custom_call.1']
    %13 = vsyncpa [#allocation5], 0
    %s14 = scalar_lea.sflag [#allocation5], 1
    %15 = vsyncpa %s14, 0
    %16 = vsyncpa [#allocation6], 0
    %s17 = scalar_lea.sflag [#allocation6], 1
    %18 = vsyncpa %s17, 0
    %19 = vsyncpa [#allocation9], 0
    %s20 = scalar_lea.sflag [#allocation9], 1
    %21 = vsyncpa %s20, 0
    loop: start=0, step=1, limit=4
    $region2: #{tpu_custom_call.1} parent=1 // loop_pre_header
      _
    $region3: #{tpu_custom_call.1} parent=1 // loop_header
      %s23 = sphi 0, %s27
      %p24 = scmp.ge.s32.totalorder %s23, 4
      %s33 = sphi 0, %s35
      %s36 = sphi 0, %s33
      %s37 = sphi 0, %s36
      %s53 = sphi 0, %s37
      %s57 = sphi 0, %s57
      %s59 = sphi 0, %s57
      %s60 = sphi 0, %s59
      %s74 = sphi 0, %s60
      %s78 = sphi 0, %s78
      %s80 = sphi 0, %s78
      %s81 = sphi 0, %s80
      %s95 = sphi 0, %s81
      %s99 = sphi 0, %s99
      %s101 = sphi 0, %s99
      %s102 = sphi 0, %s101
      %s116 = sphi 0, %s102
      %s120 = sphi 0, %s120
      %s122 = sphi 0, %s120
      %s123 = sphi 0, %s122
      %s137 = sphi 0, %s123
      %s141 = sphi 0, %s141
      %s143 = sphi 0, %s141
      %s144 = sphi 0, %s143
      %s158 = sphi 0, %s144
      %s164 = sphi 0, %s166
      %s167 = sphi 0, %s164
      %s168 = sphi 0, %s167
      %s184 = sphi 0, %s168
      %s190 = sphi 0, %s192
      %s193 = sphi 0, %s190
      %s194 = sphi 0, %s193
      %s210 = sphi 0, %s194
    $region4: #{tpu_custom_call.1} parent=1 // loop_header_branch
      %26 = sbr.rel (%p24) target = $region8
    $region5: #{tpu_custom_call.1} parent=1 // loop_body
      %s28 = ssub.s32 %s23, 1
      %s29 = ssub.s32 %s23, 2
      %s30 = sadd.s32 %s23, 1
      %s31 = ssub.s32 %s23, %s30
      %p32 = scmp.eq.s32.totalorder %s31, 0
      %s34 = sadd.s32 %s33, 1
      %s35 = scalar_select %p32, %s33, %s34
      %p38 = pneg %p32
      %p39 = scmp.eq.s32.totalorder %s23, 1
      %p40 = por %p38, %p39
      %p41 = scmp.ne.s32.totalorder %s33, %s36
      %p42 = scmp.eq.s32.totalorder %s23, 0
      %p43 = por %p41, %p42
      %p44 = scmp.ne.s32.totalorder %s33, %s36
      %p45 = scmp.eq.s32.totalorder %s28, 1
      %p46 = por %p44, %p45
      %p47 = scmp.ne.s32.totalorder %s36, %s37
      %p48 = scmp.eq.s32.totalorder %s28, 0
      %p49 = por %p47, %p48
      %p50 = scmp.ne.s32.totalorder %s36, %s37
      %p51 = scmp.eq.s32.totalorder %s29, 1
      %p52 = por %p50, %p51
      %p54 = scmp.ne.s32.totalorder %s37, %s53
      %p55 = scmp.eq.s32.totalorder %s29, 0
      %p56 = por %p54, %p55
      %s58 = sadd.s32 %s57, 1
      %p61 = scmp.eq.s32.totalorder %s23, 1
      %p62 = scmp.ne.s32.totalorder %s57, %s59
      %p63 = scmp.eq.s32.totalorder %s23, 0
      %p64 = por %p62, %p63
      %p65 = scmp.ne.s32.totalorder %s57, %s59
      %p66 = scmp.eq.s32.totalorder %s28, 1
      %p67 = por %p65, %p66
      %p68 = scmp.ne.s32.totalorder %s59, %s60
      %p69 = scmp.eq.s32.totalorder %s28, 0
      %p70 = por %p68, %p69
      %p71 = scmp.ne.s32.totalorder %s59, %s60
      %p72 = scmp.eq.s32.totalorder %s29, 1
      %p73 = por %p71, %p72
      %p75 = scmp.ne.s32.totalorder %s60, %s74
      %p76 = scmp.eq.s32.totalorder %s29, 0
      %p77 = por %p75, %p76
      %s79 = sadd.s32 %s78, 1
      %p82 = scmp.eq.s32.totalorder %s23, 1
      %p83 = scmp.ne.s32.totalorder %s78, %s80
      %p84 = scmp.eq.s32.totalorder %s23, 0
      %p85 = por %p83, %p84
      %p86 = scmp.ne.s32.totalorder %s78, %s80
      %p87 = scmp.eq.s32.totalorder %s28, 1
      %p88 = por %p86, %p87
      %p89 = scmp.ne.s32.totalorder %s80, %s81
      %p90 = scmp.eq.s32.totalorder %s28, 0
      %p91 = por %p89, %p90
      %p92 = scmp.ne.s32.totalorder %s80, %s81
      %p93 = scmp.eq.s32.totalorder %s29, 1
      %p94 = por %p92, %p93
      %p96 = scmp.ne.s32.totalorder %s81, %s95
      %p97 = scmp.eq.s32.totalorder %s29, 0
      %p98 = por %p96, %p97
      %s100 = sadd.s32 %s99, 1
      %p103 = scmp.eq.s32.totalorder %s23, 1
      %p104 = scmp.ne.s32.totalorder %s99, %s101
      %p105 = scmp.eq.s32.totalorder %s23, 0
      %p106 = por %p104, %p105
      %p107 = scmp.ne.s32.totalorder %s99, %s101
      %p108 = scmp.eq.s32.totalorder %s28, 1
      %p109 = por %p107, %p108
      %p110 = scmp.ne.s32.totalorder %s101, %s102
      %p111 = scmp.eq.s32.totalorder %s28, 0
      %p112 = por %p110, %p111
      %p113 = scmp.ne.s32.totalorder %s101, %s102
      %p114 = scmp.eq.s32.totalorder %s29, 1
      %p115 = por %p113, %p114
      %p117 = scmp.ne.s32.totalorder %s102, %s116
      %p118 = scmp.eq.s32.totalorder %s29, 0
      %p119 = por %p117, %p118
      %s121 = sadd.s32 %s120, 1
      %p124 = scmp.eq.s32.totalorder %s23, 1
      %p125 = scmp.ne.s32.totalorder %s120, %s122
      %p126 = scmp.eq.s32.totalorder %s23, 0
      %p127 = por %p125, %p126
      %p128 = scmp.ne.s32.totalorder %s120, %s122
      %p129 = scmp.eq.s32.totalorder %s28, 1
      %p130 = por %p128, %p129
      %p131 = scmp.ne.s32.totalorder %s122, %s123
      %p132 = scmp.eq.s32.totalorder %s28, 0
      %p133 = por %p131, %p132
      %p134 = scmp.ne.s32.totalorder %s122, %s123
      %p135 = scmp.eq.s32.totalorder %s29, 1
      %p136 = por %p134, %p135
      %p138 = scmp.ne.s32.totalorder %s123, %s137
      %p139 = scmp.eq.s32.totalorder %s29, 0
      %p140 = por %p138, %p139
      %s142 = sadd.s32 %s141, 1
      %p145 = scmp.eq.s32.totalorder %s23, 1
      %p146 = scmp.ne.s32.totalorder %s141, %s143
      %p147 = scmp.eq.s32.totalorder %s23, 0
      %p148 = por %p146, %p147
      %p149 = scmp.ne.s32.totalorder %s141, %s143
      %p150 = scmp.eq.s32.totalorder %s28, 1
      %p151 = por %p149, %p150
      %p152 = scmp.ne.s32.totalorder %s143, %s144
      %p153 = scmp.eq.s32.totalorder %s28, 0
      %p154 = por %p152, %p153
      %p155 = scmp.ne.s32.totalorder %s143, %s144
      %p156 = scmp.eq.s32.totalorder %s29, 1
      %p157 = por %p155, %p156
      %p159 = scmp.ne.s32.totalorder %s144, %s158
      %p160 = scmp.eq.s32.totalorder %s29, 0
      %p161 = por %p159, %p160
      %s162 = ssub.s32 %s23, %s30
      %p163 = scmp.eq.s32.totalorder %s162, 0
      %s165 = sadd.s32 %s164, 1
      %s166 = scalar_select %p163, %s164, %s165
      %p169 = pneg %p163
      %p170 = scmp.eq.s32.totalorder %s23, 1
      %p171 = por %p169, %p170
      %p172 = scmp.ne.s32.totalorder %s164, %s167
      %p173 = scmp.eq.s32.totalorder %s23, 0
      %p174 = por %p172, %p173
      %p175 = scmp.ne.s32.totalorder %s164, %s167
      %p176 = scmp.eq.s32.totalorder %s28, 1
      %p177 = por %p175, %p176
      %p178 = scmp.ne.s32.totalorder %s167, %s168
      %p179 = scmp.eq.s32.totalorder %s28, 0
      %p180 = por %p178, %p179
      %p181 = scmp.ne.s32.totalorder %s167, %s168
      %p182 = scmp.eq.s32.totalorder %s29, 1
      %p183 = por %p181, %p182
      %p185 = scmp.ne.s32.totalorder %s168, %s184
      %p186 = scmp.eq.s32.totalorder %s29, 0
      %p187 = por %p185, %p186
      %s188 = ssub.s32 %s23, %s30
      %p189 = scmp.eq.s32.totalorder %s188, 0
      %s191 = sadd.s32 %s190, 1
      %s192 = scalar_select %p189, %s190, %s191
      %p195 = pneg %p189
      %p196 = scmp.eq.s32.totalorder %s23, 1
      %p197 = por %p195, %p196
      %p198 = scmp.ne.s32.totalorder %s190, %s193
      %p199 = scmp.eq.s32.totalorder %s23, 0
      %p200 = por %p198, %p199
      %p201 = scmp.ne.s32.totalorder %s190, %s193
      %p202 = scmp.eq.s32.totalorder %s28, 1
      %p203 = por %p201, %p202
      %p204 = scmp.ne.s32.totalorder %s193, %s194
      %p205 = scmp.eq.s32.totalorder %s28, 0
      %p206 = por %p204, %p205
      %p207 = scmp.ne.s32.totalorder %s193, %s194
      %p208 = scmp.eq.s32.totalorder %s29, 1
      %p209 = por %p207, %p208
      %p211 = scmp.ne.s32.totalorder %s194, %s210
      %p212 = scmp.eq.s32.totalorder %s29, 0
      %p213 = por %p211, %p212
      %p214 = scmp.le.s32.totalorder 1, %s23
      %p215 = scmp.lt.s32.totalorder %s23, 3
      %p216 = pnand %p214, %p215
      %p217 = pneg %p216
      // Predicated region
      $region9: #{tpu_custom_call.1} parent=5 // pred_check
        _
      $region10: #{tpu_custom_call.1} parent=5 // pred_check_branch
        %219 = sbr.rel (%p216) target = $region12
      $region11: #{tpu_custom_call.1} parent=5 // pred_region
        %s220 = ssub.s32 %s23, 1
        // Predicated region
        $region13: #{tpu_custom_call.1} parent=11 // pred_check
          %p221 = pneg %p70
        $region14: #{tpu_custom_call.1} parent=11 // pred_check_branch
          %223 = sbr.rel (%p221) target = $region16
        $region15: #{tpu_custom_call.1} parent=11 // pred_region
          _
        $region16: #{tpu_custom_call.1} parent=11 // pred_fallthru
          _
        // Predicated region
        $region17: #{tpu_custom_call.1} parent=11 // pred_check
          %p224 = pneg %p91
        $region18: #{tpu_custom_call.1} parent=11 // pred_check_branch
          %226 = sbr.rel (%p224) target = $region20
        $region19: #{tpu_custom_call.1} parent=11 // pred_region
          _
        $region20: #{tpu_custom_call.1} parent=11 // pred_fallthru
          _
        // Predicated region
        $region21: #{tpu_custom_call.1} parent=11 // pred_check
          %p227 = pneg %p112
        $region22: #{tpu_custom_call.1} parent=11 // pred_check_branch
          %229 = sbr.rel (%p227) target = $region24
        $region23: #{tpu_custom_call.1} parent=11 // pred_region
          _
        $region24: #{tpu_custom_call.1} parent=11 // pred_fallthru
          _
        // Predicated region
        $region25: #{tpu_custom_call.1} parent=11 // pred_check
          %p230 = pneg %p133
        $region26: #{tpu_custom_call.1} parent=11 // pred_check_branch
          %232 = sbr.rel (%p230) target = $region28
        $region27: #{tpu_custom_call.1} parent=11 // pred_region
          _
        $region28: #{tpu_custom_call.1} parent=11 // pred_fallthru
          _
        // Predicated region
        $region29: #{tpu_custom_call.1} parent=11 // pred_check
          %p233 = pneg %p154
        $region30: #{tpu_custom_call.1} parent=11 // pred_check_branch
          %235 = sbr.rel (%p233) target = $region32
        $region31: #{tpu_custom_call.1} parent=11 // pred_region
          _
        $region32: #{tpu_custom_call.1} parent=11 // pred_fallthru
          _
      $region12: #{tpu_custom_call.1} parent=5 // pred_fallthru
        _
      %p236 = scmp.lt.s32.totalorder %s23, 2
      // Predicated region
      $region33: #{tpu_custom_call.1} parent=5 // pred_check
        %p237 = pneg %p236
      $region34: #{tpu_custom_call.1} parent=5 // pred_check_branch
        %239 = sbr.rel (%p237) target = $region36
      $region35: #{tpu_custom_call.1} parent=5 // pred_region
        // Predicated region
        $region37: #{tpu_custom_call.1} parent=35 // pred_check
          %p240 = pneg %p43
        $region38: #{tpu_custom_call.1} parent=35 // pred_check_branch
          %242 = sbr.rel (%p240) target = $region40
        $region39: #{tpu_custom_call.1} parent=35 // pred_region
          %s243 = sand.u32 %s33, 1
          %s244 = scalar_lea.sflag [#allocation5], %s243
          %s245 = sand.u32 %s33, 1
          %s246 = smul.addr %s245, 4
          %s247 = scalar_lea.vmem [#allocation4], %s246
          %s249 = ssub.s32 64, 64
          %250 = vsyncadd %s244, %s249
          %s251 = smul.addr %s23, 2
          %s252 = smul.addr %s251, 32
          %s253 = scalar_lea.hbm %s0, %s252
          %s255 = sshll.u32 %s247, 4
          %s256 = int_to_ptr.vmem [resolvable:$true] %s255
          %258 = dma.hbm_to_vmem [thread:$0]  %s253, 64, %s256, %s244
        $region40: #{tpu_custom_call.1} parent=35 // pred_fallthru
          _
      $region36: #{tpu_custom_call.1} parent=5 // pred_fallthru
        _
      %p259 = scmp.le.s32.totalorder 1, %s23
      %p260 = scmp.lt.s32.totalorder %s23, 3
      %p261 = pnand %p259, %p260
      %p262 = pneg %p261
      // Predicated region
      $region41: #{tpu_custom_call.1} parent=5 // pred_check
        _
      $region42: #{tpu_custom_call.1} parent=5 // pred_check_branch
        %264 = sbr.rel (%p261) target = $region44
      $region43: #{tpu_custom_call.1} parent=5 // pred_region
        %s265 = ssub.s32 %s23, 1
        %s266 = sand.u32 %s36, 1
        %s267 = scalar_lea.sflag [#allocation5], %s266
        %s268 = sand.u32 %s36, 1
        %s269 = smul.addr %s268, 4
        %s270 = scalar_lea.vmem [#allocation4], %s269
        // Predicated region
        $region45: #{tpu_custom_call.1} parent=43 // pred_check
          %p271 = pneg %p49
        $region46: #{tpu_custom_call.1} parent=43 // pred_check_branch
          %273 = sbr.rel (%p271) target = $region48
        $region47: #{tpu_custom_call.1} parent=43 // pred_region
          %274 = dma.done %s267, 64
        $region48: #{tpu_custom_call.1} parent=43 // pred_fallthru
          _
        %s275 = sand.u32 %s36, 1
        %s276 = scalar_lea.sflag [#allocation5], %s275
        %s277 = sand.u32 %s36, 1
        %s278 = smul.addr %s277, 4
        %s279 = scalar_lea.vmem [#allocation4], %s278
        %p280 = pneg %p49
        %p281 = pneg %p46
        %p282 = pneg %p70
        %p283 = pneg %p67
        %p284 = pneg %p91
        %p285 = pneg %p88
        %p286 = pneg %p112
        %p287 = pneg %p109
        %p288 = pneg %p133
        %p289 = pneg %p130
        %p290 = pneg %p154
        %p291 = pneg %p151
        %p292 = pneg %p180
        %p293 = pneg %p177
        %s294 = sand.u32 %s167, 1
        %s295 = scalar_lea.sflag [#allocation6], %s294
        %s296 = sand.u32 %s167, 1
        %s297 = smul.addr %s296, 16
        %s298 = scalar_lea.vmem [#allocation7], %s297
        %p299 = pneg %p206
        %p300 = pneg %p203
        %s301 = sand.u32 %s193, 1
        %s302 = scalar_lea.sflag [#allocation9], %s301
        %s303 = sand.u32 %s193, 1
        %s304 = smul.addr %s303, 4
        %s305 = scalar_lea.vmem [#allocation8], %s304
        %307 = vst [vmem:[#allocation2] sm:$0x3] 0
        %308 = vst [vmem:[#allocation2 + $0x6] sm:$0x3] 0
        %v309 = vld [vmem:[%s270] sm:$0xf]
        %310 = vst [vmem:[#allocation2 + $0x2] sm:$0xf] %v309
        %v311 = vld [vmem:[#allocation2] sm:$0x3f]
        %v312 = vld [vmem:[%s1] sm:$0x11]
        %v314 = vunpack.c.l.b16 %v312
        %v315 = vunpack.c.h.b16 %v312
        %v316 = vpack.c.b16 %v314, %v314
        %v317 = vpack.c.b16 %v315, %v315
        %v319 = vpack.i.b16 %v316, %v316
        %v321 = vlaneseq
        %v322 = vshrl.u32 %v321, 7
        %v323 = vsub.s32 0, %v322
        %v324 = vrot.slane %v319, %v323
        %v326 = vpack.i.b16 %v317, %v317
        %v328 = vlaneseq
        %v329 = vshrl.u32 %v328, 7
        %v330 = vsub.s32 0, %v329
        %v331 = vrot.slane %v326, %v330
        %v334 = vcombine.low %v324, %v331
        %v336 = vunpack.c.l.s4 1983009808
        %v337 = vunpack.c.0.s8 %v336
        %v338 = vlaneseq
        %v339 = vshrl.u32 %v338, 7
        %v340 = vsub.s32 %v337, %v339
        %v341 = vrot.slane %v334, %v340
        %342 = vrot.lane.b32.xlu0 %v341, 111
        %v343 = vpop.permute.xlu0 %342
        %v344 = vrot.slane %v343, 6
        %vm345 = vcmask 908288
        %v346 = vsel %vm345, %v344, %v343
        %v348 = vmul.bf16 %v311, %v346
        %v350 = vcombine.high %v348, %v348
        %v352 = vunpack.c.l.s4 1983009808
        %v353 = vunpack.c.0.s8 %v352
        %v354 = vlaneseq
        %v355 = vshrl.u32 %v354, 7
        %v356 = vsub.s32 %v353, %v355
        %v357 = vrot.slane %v348, %v356
        %v359 = vunpack.c.l.s4 1983009808
        %v360 = vunpack.c.0.s8 %v359
        %v361 = vlaneseq
        %v362 = vshrl.u32 %v361, 7
        %v363 = vsub.s32 %v360, %v362
        %v364 = vrot.slane %v350, %v363
        %365 = vrot.lane.b32.xlu0 %v357, 17
        %v366 = vpop.permute.xlu0 %365
        %367 = vrot.lane.b32.xlu0 %v364, 17
        %v368 = vpop.permute.xlu0 %367
        %v369 = vrot.slane %v366, 4
        %v370 = vrot.slane %v368, 4
        %vm371 = vcmask 1043456
        %v372 = vsel %vm371, %v369, %v370
        %vm373 = vcmask 138240
        %v374 = vsel %vm373, %v366, %v372
        %376 = vst [vmem:[#allocation3] sm:$0x33] %v374
        %v377 = vld [vmem:[#allocation2] sm:$0x3f]
        %v378 = vld [vmem:[%s1] sm:$0x11]
        %v380 = vunpack.c.l.b16 %v378
        %v381 = vunpack.c.h.b16 %v378
        %v382 = vpack.c.b16 %v380, %v380
        %v383 = vpack.c.b16 %v381, %v381
        %v385 = vshrl.u32 %v382, 16
        %v386 = vpack.i.b16 %v385, %v385
        %v388 = vlaneseq
        %v389 = vshrl.u32 %v388, 7
        %v390 = vsub.s32 0, %v389
        %v391 = vrot.slane %v386, %v390
        %v393 = vshrl.u32 %v383, 16
        %v394 = vpack.i.b16 %v393, %v393
        %v396 = vlaneseq
        %v397 = vshrl.u32 %v396, 7
        %v398 = vsub.s32 0, %v397
        %v399 = vrot.slane %v394, %v398
        %v402 = vcombine.low %v391, %v399
        %v404 = vunpack.c.l.s4 1983009808
        %v405 = vunpack.c.0.s8 %v404
        %v406 = vlaneseq
        %v407 = vshrl.u32 %v406, 7
        %v408 = vsub.s32 %v405, %v407
        %v409 = vrot.slane %v402, %v408
        %410 = vrot.lane.b32.xlu0 %v409, 112
        %v411 = vpop.permute.xlu0 %410
        %v412 = vrot.slane %v411, 6
        %vm413 = vcmask 916480
        %v414 = vsel %vm413, %v412, %v411
        %v416 = vmul.bf16 %v377, %v414
        %v418 = vcombine.low %v416, %v416
        %v420 = vunpack.c.l.s4 1983009808
        %v421 = vunpack.c.0.s8 %v420
        %v422 = vlaneseq
        %v423 = vshrl.u32 %v422, 7
        %v424 = vsub.s32 %v421, %v423
        %v425 = vrot.slane %v418, %v424
        %v427 = vunpack.c.l.s4 1983009808
        %v428 = vunpack.c.0.s8 %v427
        %v429 = vlaneseq
        %v430 = vshrl.u32 %v429, 7
        %v431 = vsub.s32 %v428, %v430
        %v432 = vrot.slane %v416, %v431
        %433 = vrot.lane.b32.xlu0 %v425, 16
        %v434 = vpop.permute.xlu0 %433
        %435 = vrot.lane.b32.xlu0 %v432, 16
        %v436 = vpop.permute.xlu0 %435
        %v437 = vrot.slane %v434, 4
        %v438 = vrot.slane %v436, 4
        %v439 = vsel %vm371, %v437, %v438
        %vm440 = vcmask 130048
        %v441 = vsel %vm440, %v434, %v439
        %443 = vst [vmem:[#allocation3] sm:$0xcc] %v441
        %v444 = vld [vmem:[#allocation2] sm:$0x3f]
        %v445 = vld [vmem:[%s1] sm:$0x22]
        %v447 = vunpack.c.l.b16 %v445
        %v448 = vunpack.c.h.b16 %v445
        %v449 = vpack.c.b16 %v447, %v447
        %v450 = vpack.c.b16 %v448, %v448
        %v452 = vpack.i.b16 %v449, %v449
        %v454 = vlaneseq
        %v455 = vshrl.u32 %v454, 7
        %v456 = vsub.s32 1, %v455
        %v457 = vrot.slane %v452, %v456
        %v459 = vpack.i.b16 %v450, %v450
        %v461 = vlaneseq
        %v462 = vshrl.u32 %v461, 7
        %v463 = vsub.s32 1, %v462
        %v464 = vrot.slane %v459, %v463
        %v467 = vcombine.low %v457, %v464
        %v469 = vunpack.c.l.s4 1983009808
        %v470 = vunpack.c.0.s8 %v469
        %v471 = vlaneseq
        %v472 = vshrl.u32 %v471, 7
        %v473 = vsub.s32 %v470, %v472
        %v474 = vrot.slane %v467, %v473
        %475 = vrot.lane.b32.xlu0 %v474, 113
        %v476 = vpop.permute.xlu0 %475
        %v477 = vrot.slane %v476, 6
        %vm478 = vcmask 924672
        %v479 = vsel %vm478, %v477, %v476
        %v481 = vmul.bf16 %v444, %v479
        %v483 = vcombine.high %v481, %v481
        %v485 = vunpack.c.l.s4 1983009808
        %v486 = vunpack.c.0.s8 %v485
        %v487 = vlaneseq
        %v488 = vshrl.u32 %v487, 7
        %v489 = vsub.s32 %v486, %v488
        %v490 = vrot.slane %v481, %v489
        %v492 = vunpack.c.l.s4 1983009808
        %v493 = vunpack.c.0.s8 %v492
        %v494 = vlaneseq
        %v495 = vshrl.u32 %v494, 7
        %v496 = vsub.s32 %v493, %v495
        %v497 = vrot.slane %v483, %v496
        %498 = vrot.lane.b32.xlu0 %v490, 15
        %v499 = vpop.permute.xlu0 %498
        %500 = vrot.lane.b32.xlu0 %v497, 15
        %v501 = vpop.permute.xlu0 %500
        %v502 = vrot.slane %v499, 4
        %v503 = vrot.slane %v501, 4
        %v504 = vsel %vm371, %v502, %v503
        %vm505 = vcmask 121856
        %v506 = vsel %vm505, %v499, %v504
        %508 = vst [vmem:[#allocation3 + $0x8] sm:$0x33] %v506
        %v509 = vld [vmem:[#allocation2] sm:$0x3f]
        %v510 = vld [vmem:[%s1] sm:$0x22]
        %v512 = vunpack.c.l.b16 %v510
        %v513 = vunpack.c.h.b16 %v510
        %v514 = vpack.c.b16 %v512, %v512
        %v515 = vpack.c.b16 %v513, %v513
        %v517 = vshrl.u32 %v514, 16
        %v518 = vpack.i.b16 %v517, %v517
        %v520 = vlaneseq
        %v521 = vshrl.u32 %v520, 7
        %v522 = vsub.s32 1, %v521
        %v523 = vrot.slane %v518, %v522
        %v525 = vshrl.u32 %v515, 16
        %v526 = vpack.i.b16 %v525, %v525
        %v528 = vlaneseq
        %v529 = vshrl.u32 %v528, 7
        %v530 = vsub.s32 1, %v529
        %v531 = vrot.slane %v526, %v530
        %v534 = vcombine.low %v523, %v531
        %v536 = vunpack.c.l.s4 1983009808
        %v537 = vunpack.c.0.s8 %v536
        %v538 = vlaneseq
        %v539 = vshrl.u32 %v538, 7
        %v540 = vsub.s32 %v537, %v539
        %v541 = vrot.slane %v534, %v540
        %542 = vrot.lane.b32.xlu0 %v541, 127
        %v543 = vpop.permute.xlu0 %542
        %v544 = vrot.slane %v543, 6
        %vm545 = vcmask 1039360
        %v546 = vsel %vm545, %v544, %v543
        %v548 = vmul.bf16 %v509, %v546
        %v550 = vcombine.low %v548, %v548
        %v552 = vunpack.c.l.s4 1983009808
        %v553 = vunpack.c.0.s8 %v552
        %v554 = vlaneseq
        %v555 = vshrl.u32 %v554, 7
        %v556 = vsub.s32 %v553, %v555
        %v557 = vrot.slane %v550, %v556
        %v559 = vunpack.c.l.s4 1983009808
        %v560 = vunpack.c.0.s8 %v559
        %v561 = vlaneseq
        %v562 = vshrl.u32 %v561, 7
        %v563 = vsub.s32 %v560, %v562
        %v564 = vrot.slane %v548, %v563
        %565 = vrot.lane.b32.xlu0 %v557, 1
        %v566 = vpop.permute.xlu0 %565
        %567 = vrot.lane.b32.xlu0 %v564, 1
        %v568 = vpop.permute.xlu0 %567
        %v569 = vrot.slane %v566, 4
        %v570 = vrot.slane %v568, 4
        %v571 = vsel %vm371, %v569, %v570
        %vm572 = vcmask 7168
        %v573 = vsel %vm572, %v566, %v571
        %575 = vst [vmem:[#allocation3 + $0x8] sm:$0xcc] %v573
        %v576 = vld [vmem:[#allocation2 + $0x2] sm:$0xf]
        %v577 = vld [vmem:[%s1] sm:$0x44]
        %v579 = vunpack.c.l.b16 %v577
        %v580 = vunpack.c.h.b16 %v577
        %v581 = vpack.c.b16 %v579, %v579
        %v582 = vpack.c.b16 %v580, %v580
        %v584 = vpack.i.b16 %v581, %v581
        %v586 = vlaneseq
        %v587 = vshrl.u32 %v586, 7
        %v588 = vsub.s32 2, %v587
        %v589 = vrot.slane %v584, %v588
        %v591 = vpack.i.b16 %v582, %v582
        %v593 = vlaneseq
        %v594 = vshrl.u32 %v593, 7
        %v595 = vsub.s32 2, %v594
        %v596 = vrot.slane %v591, %v595
        %v599 = vcombine.low %v589, %v596
        %v601 = vunpack.c.l.s4 1983009808
        %v602 = vunpack.c.0.s8 %v601
        %v603 = vlaneseq
        %v604 = vshrl.u32 %v603, 7
        %v605 = vsub.s32 %v602, %v604
        %v606 = vrot.slane %v599, %v605
        %v608 = vmul.bf16 %v576, %v606
        %v611 = vunpack.c.l.s4 1983009808
        %v612 = vunpack.c.0.s8 %v611
        %v613 = vlaneseq
        %v614 = vshrl.u32 %v613, 7
        %v615 = vsub.s32 %v612, %v614
        %v616 = vrot.slane %v608, %v615
        %618 = vst [vmem:[#allocation3 + $0x10] sm:$0x33] %v616
        %v619 = vld [vmem:[#allocation2 + $0x2] sm:$0x3f]
        %v620 = vld [vmem:[%s1] sm:$0x44]
        %v622 = vunpack.c.l.b16 %v620
        %v623 = vunpack.c.h.b16 %v620
        %v624 = vpack.c.b16 %v622, %v622
        %v625 = vpack.c.b16 %v623, %v623
        %v627 = vshrl.u32 %v624, 16
        %v628 = vpack.i.b16 %v627, %v627
        %v630 = vlaneseq
        %v631 = vshrl.u32 %v630, 7
        %v632 = vsub.s32 2, %v631
        %v633 = vrot.slane %v628, %v632
        %v635 = vshrl.u32 %v625, 16
        %v636 = vpack.i.b16 %v635, %v635
        %v638 = vlaneseq
        %v639 = vshrl.u32 %v638, 7
        %v640 = vsub.s32 2, %v639
        %v641 = vrot.slane %v636, %v640
        %v644 = vcombine.low %v633, %v641
        %v646 = vunpack.c.l.s4 1983009808
        %v647 = vunpack.c.0.s8 %v646
        %v648 = vlaneseq
        %v649 = vshrl.u32 %v648, 7
        %v650 = vsub.s32 %v647, %v649
        %v651 = vrot.slane %v644, %v650
        %652 = vrot.lane.b32.xlu0 %v651, 1
        %v653 = vpop.permute.xlu0 %652
        %v654 = vrot.slane %v653, 6
        %v655 = vsel %vm572, %v654, %v653
        %v657 = vmul.bf16 %v619, %v655
        %v659 = vcombine.low %v657, %v657
        %v661 = vunpack.c.l.s4 1983009808
        %v662 = vunpack.c.0.s8 %v661
        %v663 = vlaneseq
        %v664 = vshrl.u32 %v663, 7
        %v665 = vsub.s32 %v662, %v664
        %v666 = vrot.slane %v659, %v665
        %v668 = vunpack.c.l.s4 1983009808
        %v669 = vunpack.c.0.s8 %v668
        %v670 = vlaneseq
        %v671 = vshrl.u32 %v670, 7
        %v672 = vsub.s32 %v669, %v671
        %v673 = vrot.slane %v657, %v672
        %674 = vrot.lane.b32.xlu0 %v666, 127
        %v675 = vpop.permute.xlu0 %674
        %676 = vrot.lane.b32.xlu0 %v673, 127
        %v677 = vpop.permute.xlu0 %676
        %v678 = vrot.slane %v675, 4
        %v679 = vrot.slane %v677, 4
        %v680 = vsel %vm371, %v678, %v679
        %v681 = vsel %vm545, %v675, %v680
        %683 = vst [vmem:[#allocation3 + $0x10] sm:$0xcc] %v681
        %v684 = vld [vmem:[#allocation2 + $0x2] sm:$0x3f]
        %v685 = vld [vmem:[%s1] sm:$0x88]
        %v687 = vunpack.c.l.b16 %v685
        %v688 = vunpack.c.h.b16 %v685
        %v689 = vpack.c.b16 %v687, %v687
        %v690 = vpack.c.b16 %v688, %v688
        %v692 = vpack.i.b16 %v689, %v689
        %v694 = vlaneseq
        %v695 = vshrl.u32 %v694, 7
        %v696 = vsub.s32 3, %v695
        %v697 = vrot.slane %v692, %v696
        %v699 = vpack.i.b16 %v690, %v690
        %v701 = vlaneseq
        %v702 = vshrl.u32 %v701, 7
        %v703 = vsub.s32 3, %v702
        %v704 = vrot.slane %v699, %v703
        %v707 = vcombine.low %v697, %v704
        %v709 = vunpack.c.l.s4 1983009808
        %v710 = vunpack.c.0.s8 %v709
        %v711 = vlaneseq
        %v712 = vshrl.u32 %v711, 7
        %v713 = vsub.s32 %v710, %v712
        %v714 = vrot.slane %v707, %v713
        %715 = vrot.lane.b32.xlu0 %v714, 15
        %v716 = vpop.permute.xlu0 %715
        %v717 = vrot.slane %v716, 6
        %v718 = vsel %vm505, %v717, %v716
        %v720 = vmul.bf16 %v684, %v718
        %v722 = vcombine.high %v720, %v720
        %v724 = vunpack.c.l.s4 1983009808
        %v725 = vunpack.c.0.s8 %v724
        %v726 = vlaneseq
        %v727 = vshrl.u32 %v726, 7
        %v728 = vsub.s32 %v725, %v727
        %v729 = vrot.slane %v720, %v728
        %v731 = vunpack.c.l.s4 1983009808
        %v732 = vunpack.c.0.s8 %v731
        %v733 = vlaneseq
        %v734 = vshrl.u32 %v733, 7
        %v735 = vsub.s32 %v732, %v734
        %v736 = vrot.slane %v722, %v735
        %737 = vrot.lane.b32.xlu0 %v729, 113
        %v738 = vpop.permute.xlu0 %737
        %739 = vrot.lane.b32.xlu0 %v736, 113
        %v740 = vpop.permute.xlu0 %739
        %v741 = vrot.slane %v738, 4
        %v742 = vrot.slane %v740, 4
        %v743 = vsel %vm371, %v741, %v742
        %v744 = vsel %vm478, %v738, %v743
        %746 = vst [vmem:[#allocation3 + $0x18] sm:$0x33] %v744
        %v747 = vld [vmem:[#allocation2 + $0x2] sm:$0x3f]
        %v748 = vld [vmem:[%s1] sm:$0x88]
        %v750 = vunpack.c.l.b16 %v748
        %v751 = vunpack.c.h.b16 %v748
        %v752 = vpack.c.b16 %v750, %v750
        %v753 = vpack.c.b16 %v751, %v751
        %v755 = vshrl.u32 %v752, 16
        %v756 = vpack.i.b16 %v755, %v755
        %v758 = vlaneseq
        %v759 = vshrl.u32 %v758, 7
        %v760 = vsub.s32 3, %v759
        %v761 = vrot.slane %v756, %v760
        %v763 = vshrl.u32 %v753, 16
        %v764 = vpack.i.b16 %v763, %v763
        %v766 = vlaneseq
        %v767 = vshrl.u32 %v766, 7
        %v768 = vsub.s32 3, %v767
        %v769 = vrot.slane %v764, %v768
        %v772 = vcombine.low %v761, %v769
        %v774 = vunpack.c.l.s4 1983009808
        %v775 = vunpack.c.0.s8 %v774
        %v776 = vlaneseq
        %v777 = vshrl.u32 %v776, 7
        %v778 = vsub.s32 %v775, %v777
        %v779 = vrot.slane %v772, %v778
        %780 = vrot.lane.b32.xlu0 %v779, 16
        %v781 = vpop.permute.xlu0 %780
        %v782 = vrot.slane %v781, 6
        %v783 = vsel %vm440, %v782, %v781
        %v785 = vmul.bf16 %v747, %v783
        %v787 = vcombine.low %v785, %v785
        %v789 = vunpack.c.l.s4 1983009808
        %v790 = vunpack.c.0.s8 %v789
        %v791 = vlaneseq
        %v792 = vshrl.u32 %v791, 7
        %v793 = vsub.s32 %v790, %v792
        %v794 = vrot.slane %v787, %v793
        %v796 = vunpack.c.l.s4 1983009808
        %v797 = vunpack.c.0.s8 %v796
        %v798 = vlaneseq
        %v799 = vshrl.u32 %v798, 7
        %v800 = vsub.s32 %v797, %v799
        %v801 = vrot.slane %v785, %v800
        %802 = vrot.lane.b32.xlu0 %v794, 112
        %v803 = vpop.permute.xlu0 %802
        %804 = vrot.lane.b32.xlu0 %v801, 112
        %v805 = vpop.permute.xlu0 %804
        %v806 = vrot.slane %v803, 4
        %v807 = vrot.slane %v805, 4
        %v808 = vsel %vm371, %v806, %v807
        %v809 = vsel %vm413, %v803, %v808
        %811 = vst [vmem:[#allocation3 + $0x18] sm:$0xcc] %v809
        %v812 = vld [vmem:[#allocation2 + $0x2] sm:$0x3f]
        %v813 = vld [vmem:[%s1 + $0x8] sm:$0x11]
        %v815 = vunpack.c.l.b16 %v813
        %v816 = vunpack.c.h.b16 %v813
        %v817 = vpack.c.b16 %v815, %v815
        %v818 = vpack.c.b16 %v816, %v816
        %v820 = vpack.i.b16 %v817, %v817
        %v822 = vlaneseq
        %v823 = vshrl.u32 %v822, 7
        %v824 = vsub.s32 0, %v823
        %v825 = vrot.slane %v820, %v824
        %v827 = vpack.i.b16 %v818, %v818
        %v829 = vlaneseq
        %v830 = vshrl.u32 %v829, 7
        %v831 = vsub.s32 0, %v830
        %v832 = vrot.slane %v827, %v831
        %v835 = vcombine.low %v825, %v832
        %v837 = vunpack.c.l.s4 1983009808
        %v838 = vunpack.c.0.s8 %v837
        %v839 = vlaneseq
        %v840 = vshrl.u32 %v839, 7
        %v841 = vsub.s32 %v838, %v840
        %v842 = vrot.slane %v835, %v841
        %843 = vrot.lane.b32.xlu0 %v842, 17
        %v844 = vpop.permute.xlu0 %843
        %v845 = vrot.slane %v844, 6
        %v846 = vsel %vm373, %v845, %v844
        %v848 = vmul.bf16 %v812, %v846
        %v850 = vcombine.high %v848, %v848
        %v852 = vunpack.c.l.s4 1983009808
        %v853 = vunpack.c.0.s8 %v852
        %v854 = vlaneseq
        %v855 = vshrl.u32 %v854, 7
        %v856 = vsub.s32 %v853, %v855
        %v857 = vrot.slane %v848, %v856
        %v859 = vunpack.c.l.s4 1983009808
        %v860 = vunpack.c.0.s8 %v859
        %v861 = vlaneseq
        %v862 = vshrl.u32 %v861, 7
        %v863 = vsub.s32 %v860, %v862
        %v864 = vrot.slane %v850, %v863
        %865 = vrot.lane.b32.xlu0 %v857, 111
        %v866 = vpop.permute.xlu0 %865
        %867 = vrot.lane.b32.xlu0 %v864, 111
        %v868 = vpop.permute.xlu0 %867
        %v869 = vrot.slane %v866, 4
        %v870 = vrot.slane %v868, 4
        %v871 = vsel %vm371, %v869, %v870
        %v872 = vsel %vm345, %v866, %v871
        %874 = vst [vmem:[#allocation3 + $0x20] sm:$0x33] %v872
        %v875 = vld [vmem:[%s2] sm:$0xf]
        %v876 = vld [vmem:[%s2 + $0x4] sm:$0xf]
        %v877 = vld [vmem:[%s2 + $0x8] sm:$0xf]
        %v878 = vld [vmem:[%s2 + $0xc] sm:$0xf]
        %v879 = vld [vmem:[#allocation3] sm:$0xff]
        %v880 = vld [vmem:[#allocation3 + $0x8] sm:$0xff]
        %v881 = vld [vmem:[#allocation3 + $0x10] sm:$0xff]
        %v882 = vld [vmem:[#allocation3 + $0x18] sm:$0xff]
        %v883 = vld [vmem:[#allocation3 + $0x20] sm:$0x33]
        %v884 = vld [vmem:[%s3] sm:$0xff]
        %v885 = vld [vmem:[%s3 + $0x8] sm:$0xff]
        %v886 = vld [vmem:[%s3 + $0x10] sm:$0xff]
        %v887 = vld [vmem:[%s3 + $0x18] sm:$0xff]
        %889 = vset.pattern.permute.xlu0 0
        %890 = vperm.xlu0 %889, %v884
        %v891 = vpop.permute.xlu0 %890
        %894 = vset.pattern.permute.xlu0 0
        %895 = vperm.xlu0 %894, %v885
        %v896 = vpop.permute.xlu0 %895
        %899 = vset.pattern.permute.xlu0 0
        %900 = vperm.xlu0 %899, %v886
        %v901 = vpop.permute.xlu0 %900
        %904 = vset.pattern.permute.xlu0 0
        %905 = vperm.xlu0 %904, %v887
        %v906 = vpop.permute.xlu0 %905
        %v912 = vunpack.c.l.b16 %v875
        %v913 = vunpack.c.l.b16 %v876
        %v914 = vunpack.c.l.b16 %v877
        %v915 = vunpack.c.l.b16 %v878
        %v916 = vpack.c.b16 %v913, %v912
        %v917 = vpack.c.b16 %v915, %v914
        %v923 = vunpack.c.l.b16 %v879
        %v924 = vunpack.c.h.b16 %v879
        %v925 = vunpack.c.l.b16 %v880
        %v926 = vunpack.c.h.b16 %v880
        %v927 = vunpack.c.l.b16 %v881
        %v928 = vunpack.c.h.b16 %v881
        %v929 = vunpack.c.l.b16 %v882
        %v930 = vunpack.c.h.b16 %v882
        %v931 = vunpack.c.l.b16 %v883
        %v932 = vunpack.c.h.b16 %v883
        %v933 = vpack.c.b16 %v925, %v923
        %v934 = vpack.c.b16 %v926, %v924
        %v935 = vpack.c.b16 %v929, %v927
        %v936 = vpack.c.b16 %v930, %v928
        %v937 = vpack.c.b16 %v931, %v931
        %v938 = vpack.c.b16 %v932, %v932
        %vm943 = vcmask 293888
        %v945 = vsel %vm943, %v916, 0
        %v948 = vsel %vm943, %v917, 0
        %vm950 = vcmask 1041408
        %v952 = vsel %vm950, %v937, 0
        %v955 = vsel %vm950, %v938, 0
        %957 = vmatprep.subr.bf16.mxu0 %v934
        %958 = vmatpush1.bf16.msra.mxu0 %v933
        %959 = vmatprep.subr.bf16.mxu0 %v936
        %960 = vmatpush1.bf16.msra.mxu0 %v935
        %961 = vmatprep.subr.bf16.mxu0 %v955
        %962 = vmatpush1.bf16.msra.mxu0 %v952
        %963 = vmatprep.subr.bf16.mxu0 0
        %964 = vmatpush1.bf16.msra.mxu0 0
        %965 = vmatprep.subr.bf16.mxu0 0
        %966 = vmatpush1.bf16.msra.mxu0 0
        %967 = vmatprep.subr.bf16.mxu0 0
        %968 = vmatpush1.bf16.msra.mxu0 0
        %969 = vmatprep.subr.bf16.mxu0 0
        %970 = vmatpush1.bf16.msra.mxu0 0
        %971 = vmatprep.subr.bf16.mxu0 0
        %972 = vmatpush1.bf16.msra.mxu0 0
        %973 = vmatprep.subr.bf16.mxu0 0
        %974 = vmatpush1.bf16.msra.mxu0 0
        %975 = vmatprep.subr.bf16.mxu0 0
        %976 = vmatpush1.bf16.msra.mxu0 0
        %977 = vmatprep.subr.bf16.mxu0 0
        %978 = vmatpush1.bf16.msra.mxu0 0
        %979 = vmatprep.subr.bf16.mxu0 0
        %980 = vmatpush1.bf16.msra.mxu0 0
        %981 = vmatprep.subr.bf16.mxu0 0
        %982 = vmatpush1.bf16.msra.mxu0 0
        %983 = vmatprep.subr.bf16.mxu0 0
        %984 = vmatpush1.bf16.msra.mxu0 0
        %985 = vmatprep.subr.bf16.mxu0 0
        %986 = vmatpush1.bf16.msra.mxu0 0
        %987 = vmatprep.subr.bf16.mxu0 0
        %988 = vmatpush1.bf16.msra.mxu0 0
        %989 = vmatprep.mubr.bf16.mxu0 0
        %990 = vmatmul.mubr.bf16.gmra.mrb[0].mxu0 %v945
        %v991 = vpop.f32.mrb[0].mxu0
        %v992 = vadd.f32 %v891, %v991
        %v993 = vpop.f32.mrb[0].mxu0
        %v994 = vadd.f32 %v891, %v993
        %v995 = vpop.f32.mrb[0].mxu0
        %v996 = vadd.f32 %v896, %v995
        %v997 = vpop.f32.mrb[0].mxu0
        %v998 = vadd.f32 %v896, %v997
        %999 = vmatprep.mubr.bf16.mxu0 0
        %1000 = vmatmul.mubr.bf16.gmra.mrb[0].mxu0 %v948
        %v1001 = vpop.f32.mrb[0].mxu0
        %v1002 = vadd.f32 %v901, %v1001
        %v1003 = vpop.f32.mrb[0].mxu0
        %v1004 = vadd.f32 %v901, %v1003
        %v1005 = vpop.f32.mrb[0].mxu0
        %v1006 = vadd.f32 %v906, %v1005
        %v1007 = vpop.f32.mrb[0].mxu0
        %v1008 = vadd.f32 %v906, %v1007
        %1009 = vdwg.mxu0
        %v1010 = vmax.f32 %v992, 0.0
        %v1011 = vmax.f32 %v994, 0.0
        %v1012 = vmax.f32 %v996, 0.0
        %v1013 = vmax.f32 %v998, 0.0
        %v1014 = vmax.f32 %v1002, 0.0
        %v1015 = vmax.f32 %v1004, 0.0
        %v1016 = vmax.f32 %v1006, 0.0
        %v1017 = vmax.f32 %v1008, 0.0
        %v1018 = vld [vmem:[%s4] sm:$0xff]
        %v1019 = vld [vmem:[%s4 + $0x8] sm:$0x3]
        %v1020 = vld [vmem:[%s5] sm:$0xff]
        %v1021 = vld [vmem:[%s5 + $0x8] sm:$0x3]
        %1023 = vset.pattern.permute.xlu0 0
        %1024 = vperm.xlu0 %1023, %v1020
        %v1025 = vpop.permute.xlu0 %1024
        %1028 = vset.pattern.permute.xlu0 0
        %1029 = vperm.xlu0 %1028, %v1021
        %v1030 = vpop.permute.xlu0 %1029
        %vm1032 = vcmask 261120
        %v1034 = vsel %vm1032, %v1018, 0
        %v1037 = vsel %vm1032, %v1019, 0
        %1039 = vmatprep.subr.mxu0 %v1011
        %1040 = vmatpush1.msra.mxu0 %v1010
        %1041 = vmatprep.subr.mxu0 %v1013
        %1042 = vmatpush1.msra.mxu0 %v1012
        %1043 = vmatprep.subr.mxu0 %v1015
        %1044 = vmatpush1.msra.mxu0 %v1014
        %1045 = vmatprep.subr.mxu0 %v1017
        %1046 = vmatpush1.msra.mxu0 %v1016
        %1047 = vmatprep.subr.mxu0 0.0
        %1048 = vmatpush1.msra.mxu0 0.0
        %1049 = vmatprep.subr.mxu0 0.0
        %1050 = vmatpush1.msra.mxu0 0.0
        %1051 = vmatprep.subr.mxu0 0.0
        %1052 = vmatpush1.msra.mxu0 0.0
        %1053 = vmatprep.subr.mxu0 0.0
        %1054 = vmatpush1.msra.mxu0 0.0
        %1055 = vmatprep.subr.mxu0 0.0
        %1056 = vmatpush1.msra.mxu0 0.0
        %1057 = vmatprep.subr.mxu0 0.0
        %1058 = vmatpush1.msra.mxu0 0.0
        %1059 = vmatprep.subr.mxu0 0.0
        %1060 = vmatpush1.msra.mxu0 0.0
        %1061 = vmatprep.subr.mxu0 0.0
        %1062 = vmatpush1.msra.mxu0 0.0
        %1063 = vmatprep.subr.mxu0 0.0
        %1064 = vmatpush1.msra.mxu0 0.0
        %1065 = vmatprep.subr.mxu0 0.0
        %1066 = vmatpush1.msra.mxu0 0.0
        %1067 = vmatprep.subr.mxu0 0.0
        %1068 = vmatpush1.msra.mxu0 0.0
        %1069 = vmatprep.subr.mxu0 0.0
        %1070 = vmatpush1.msra.mxu0 0.0
        %1071 = vmatprep.subr.mxu0 0.0
        %1072 = vmatpush1.msra.mxu0 0.0
        %1073 = vmatprep.subr.mxu0 0.0
        %1074 = vmatpush1.msra.mxu0 0.0
        %1075 = vmatprep.subr.mxu0 0.0
        %1076 = vmatpush1.msra.mxu0 0.0
        %1077 = vmatprep.subr.mxu0 0.0
        %1078 = vmatpush1.msra.mxu0 0.0
        %1079 = vmatprep.subr.mxu0 0.0
        %1080 = vmatpush1.msra.mxu0 0.0
        %1081 = vmatprep.subr.mxu0 0.0
        %1082 = vmatpush1.msra.mxu0 0.0
        %1083 = vmatprep.subr.mxu0 0.0
        %1084 = vmatpush1.msra.mxu0 0.0
        %1085 = vmatprep.subr.mxu0 0.0
        %1086 = vmatpush1.msra.mxu0 0.0
        %1087 = vmatprep.subr.mxu0 0.0
        %1088 = vmatpush1.msra.mxu0 0.0
        %1089 = vmatprep.subr.mxu0 0.0
        %1090 = vmatpush1.msra.mxu0 0.0
        %1091 = vmatprep.subr.mxu0 0.0
        %1092 = vmatpush1.msra.mxu0 0.0
        %1093 = vmatprep.subr.mxu0 0.0
        %1094 = vmatpush1.msra.mxu0 0.0
        %1095 = vmatprep.subr.mxu0 0.0
        %1096 = vmatpush1.msra.mxu0 0.0
        %1097 = vmatprep.subr.mxu0 0.0
        %1098 = vmatpush1.msra.mxu0 0.0
        %1099 = vmatprep.subr.mxu0 0.0
        %1100 = vmatpush1.msra.mxu0 0.0
        %1101 = vmatprep.subr.mxu0 0.0
        %1102 = vmatpush1.msra.mxu0 0.0
        %1103 = vmatprep.mubr.f32.mxu0 0.0
        %1104 = vmatmul.mubr.f32.gmra.mrb[0].mxu0 %v1034
        %v1105 = vpop.f32.mrb[0].mxu0
        %v1106 = vadd.f32 %v1025, %v1105
        %v1107 = vpop.f32.mrb[0].mxu0
        %v1108 = vadd.f32 %v1025, %v1107
        %1109 = vmatprep.mubr.f32.mxu0 0.0
        %1110 = vmatmul.mubr.f32.gmra.mrb[0].mxu0 %v1037
        %v1111 = vpop.f32.mrb[0].mxu0
        %v1112 = vadd.f32 %v1030, %v1111
        %v1113 = vpop.f32.mrb[0].mxu0
        %v1114 = vadd.f32 %v1030, %v1113
        %1115 = vdwg.mxu0
        %1116 = vst [vmem:[%s298] sm:$0xff] %v1106
        %1117 = vst [vmem:[%s298 + $0x8] sm:$0xff] %v1108
        %v1120 = vcombine.low %v1112, %v1114
        %v1122 = vunpack.c.l.s4 1983009808
        %v1123 = vunpack.c.0.s8 %v1122
        %v1124 = vlaneseq
        %v1125 = vshrl.u32 %v1124, 7
        %v1126 = vsub.s32 %v1123, %v1125
        %v1127 = vrot.slane %v1120, %v1126
        %1129 = vst [vmem:[%s305] sm:$0xf] %v1127
        %s1130 = sand.u32 %s167, 1
        %s1131 = scalar_lea.sflag [#allocation6], %s1130
        %s1132 = sand.u32 %s167, 1
        %s1133 = smul.addr %s1132, 16
        %s1134 = scalar_lea.vmem [#allocation7], %s1133
        %s1135 = sand.u32 %s193, 1
        %s1136 = scalar_lea.sflag [#allocation9], %s1135
        %s1137 = sand.u32 %s193, 1
        %s1138 = smul.addr %s1137, 4
        %s1139 = scalar_lea.vmem [#allocation8], %s1138
        // Predicated region
        $region49: #{tpu_custom_call.1} parent=43 // pred_check
          %p1140 = pneg %p177
        $region50: #{tpu_custom_call.1} parent=43 // pred_check_branch
          %1142 = sbr.rel (%p1140) target = $region52
        $region51: #{tpu_custom_call.1} parent=43 // pred_region
          %s1144 = ssub.s32 256, 256
          %1145 = vsyncadd %s1131, %s1144
          %s1146 = smul.addr %s28, 2
          %s1147 = smul.addr %s1146, 128
          %s1148 = scalar_lea.hbm %s6, %s1147
          %s1150 = sshll.u32 %s1134, 4
          %s1151 = int_to_ptr.vmem [resolvable:$true] %s1150
          %1153 = dma.vmem_to_hbm [thread:$0]  %s1151, 256, %s1148, %s1131
        $region52: #{tpu_custom_call.1} parent=43 // pred_fallthru
          _
        // Predicated region
        $region53: #{tpu_custom_call.1} parent=43 // pred_check
          %p1154 = pneg %p203
        $region54: #{tpu_custom_call.1} parent=43 // pred_check_branch
          %1156 = sbr.rel (%p1154) target = $region56
        $region55: #{tpu_custom_call.1} parent=43 // pred_region
          %s1158 = ssub.s32 64, 64
          %1159 = vsyncadd %s1136, %s1158
          %s1160 = smul.addr %s28, 2
          %s1161 = smul.addr %s1160, 32
          %s1162 = scalar_lea.hbm %s7, %s1161
          %s1164 = sshll.u32 %s1139, 4
          %s1165 = int_to_ptr.vmem [resolvable:$true] %s1164
          %1167 = dma.vmem_to_hbm [thread:$0]  %s1165, 64, %s1162, %s1136
        $region56: #{tpu_custom_call.1} parent=43 // pred_fallthru
          _
      $region44: #{tpu_custom_call.1} parent=5 // pred_fallthru
        _
      %p1168 = scmp.le.s32.totalorder 2, %s23
      // Predicated region
      $region57: #{tpu_custom_call.1} parent=5 // pred_check
        %p1169 = pneg %p1168
      $region58: #{tpu_custom_call.1} parent=5 // pred_check_branch
        %1171 = sbr.rel (%p1169) target = $region60
      $region59: #{tpu_custom_call.1} parent=5 // pred_region
        %s1172 = ssub.s32 %s23, 2
        // Predicated region
        $region61: #{tpu_custom_call.1} parent=59 // pred_check
          %p1173 = pneg %p183
        $region62: #{tpu_custom_call.1} parent=59 // pred_check_branch
          %1175 = sbr.rel (%p1173) target = $region64
        $region63: #{tpu_custom_call.1} parent=59 // pred_region
          %s1176 = sand.u32 %s168, 1
          %s1177 = scalar_lea.sflag [#allocation6], %s1176
          %s1178 = sand.u32 %s168, 1
          %s1179 = smul.addr %s1178, 16
          %s1180 = scalar_lea.vmem [#allocation7], %s1179
          %1181 = dma.done %s1177, 256
        $region64: #{tpu_custom_call.1} parent=59 // pred_fallthru
          _
        // Predicated region
        $region65: #{tpu_custom_call.1} parent=59 // pred_check
          %p1182 = pneg %p209
        $region66: #{tpu_custom_call.1} parent=59 // pred_check_branch
          %1184 = sbr.rel (%p1182) target = $region68
        $region67: #{tpu_custom_call.1} parent=59 // pred_region
          %s1185 = sand.u32 %s194, 1
          %s1186 = scalar_lea.sflag [#allocation9], %s1185
          %s1187 = sand.u32 %s194, 1
          %s1188 = smul.addr %s1187, 4
          %s1189 = scalar_lea.vmem [#allocation8], %s1188
          %1190 = dma.done %s1186, 64
        $region68: #{tpu_custom_call.1} parent=59 // pred_fallthru
          _
      $region60: #{tpu_custom_call.1} parent=5 // pred_fallthru
        _
    $region6: #{tpu_custom_call.1} parent=1 // loop_footer
      %s27 = sadd.s32 1, %s23
    $region7: #{tpu_custom_call.1} parent=1 // loop_footer_branch
      %22 = sbr.rel target = $region3
    $region8: #{tpu_custom_call.1} parent=1 // loop_exit
      _
    %1191 = vsyncpa [#allocation5], 1
    %s1192 = scalar_lea.sflag [#allocation5], 1
    %1193 = vsyncpa %s1192, 1
    %1194 = vsyncpa [#allocation6], 1
    %s1195 = scalar_lea.sflag [#allocation6], 1
    %1196 = vsyncpa %s1195, 1
    %1197 = vsyncpa [#allocation9], 1
    %s1198 = scalar_lea.sflag [#allocation9], 1
    %1199 = vsyncpa %s1198, 1

</llo_original>
